<compile_context>
chip_gen: v5e
topology: v5e:2x2
jax: 0.10.0
libtpu: 0.0.40
codegen_flags: <defaults>
</compile_context>

<pallas_src>
import math

import jax
import jax.numpy as jnp
from jax import lax
from jax.experimental import pallas as pl
from jax.experimental.pallas import tpu as pltpu


def _round_up(x, m):
    return ((x + m - 1) // m) * m


# ---------------------------------------------------------------------------
# Kernels
# ---------------------------------------------------------------------------
def _l2norm_packed_kernel(x_ref, m_ref, o_ref):
    """Lane-dense path. Each packed row holds `pack` original rows side by side
    across the 128 lanes. m_ref is a (128,128) block-diagonal ones matrix
    (M[i,j] = 1 iff i//d == j//d), so (x*x) @ M broadcasts each segment's sum
    of squares back over its own lanes. One vmatmul per tile; MXU is otherwise
    idle, so the segment reduction is effectively free."""
    x = x_ref[...].astype(jnp.float32)
    seg_sq = jnp.dot(
        x * x,
        m_ref[...],
        preferred_element_type=jnp.float32,
        precision=lax.Precision.HIGHEST,  # keep f32 accuracy on the MXU
    )
    o_ref[...] = (x * lax.rsqrt(seg_sq)).astype(o_ref.dtype)


def _l2norm_rowwise_kernel(x_ref, o_ref):
    """Fallback path for last dims that don't pack evenly into 128 lanes."""
    x = x_ref[...].astype(jnp.float32)
    sq_sum = jnp.sum(x * x, axis=-1, keepdims=True)
    o_ref[...] = (x * lax.rsqrt(sq_sum)).astype(o_ref.dtype)


# ---------------------------------------------------------------------------
# Tiling helpers
# ---------------------------------------------------------------------------
_TARGET_BLOCK_BYTES = 2 * 1024 * 1024  # ~2 MiB per block; with 2x in + 2x out
                                       # double-buffering that's ~8 MiB of VMEM.


def _pick_row_tile(n_rows, row_bytes):
    """Largest 8-aligned row tile whose block is ~_TARGET_BLOCK_BYTES, capped at
    the (8-aligned) row count. If everything fits in one tile, split into two so
    the single grid axis can shard across v7x's two TensorCores."""
    rows_aligned = _round_up(n_rows, 8)
    tr = max(8, (_TARGET_BLOCK_BYTES // row_bytes) // 8 * 8)
    tr = min(tr, rows_aligned)
    if rows_aligned > 8 and pl.cdiv(rows_aligned, tr) == 1:
        tr = max(8, _round_up(rows_aligned // 2, 8))
    return tr


def _cost(rows, d, itemsize):
    return pl.CostEstimate(
        flops=3 * rows * d,          # square, reduce, multiply
        transcendentals=rows,        # one rsqrt per row
        bytes_accessed=2 * rows * d * itemsize,
    )


# ---------------------------------------------------------------------------
# Wrappers
# ---------------------------------------------------------------------------
def _l2_normalize_2d_packed(x2d, d, out_dtype):
    rows = x2d.shape[0]
    itemsize = jnp.dtype(x2d.dtype).itemsize
    pack = 128 // d
    lane = pack * d  # == 128

    n_packed = pl.cdiv(rows, pack)
    tr = _pick_row_tile(n_packed, lane * itemsize)
    n_packed_padded = _round_up(n_packed, tr)
    rows_padded = n_packed_padded * pack
    if rows_padded != rows:
        # Pad with ones: padded rows normalize to finite values, then get sliced off.
        x2d = jnp.pad(x2d, ((0, rows_padded - rows), (0, 0)), constant_values=1)

    # Free row-major reshape: `pack` consecutive original rows per 128-lane row.
    xp = x2d.reshape(n_packed_padded, lane)

    seg_ids = jnp.arange(lane, dtype=jnp.int32) // d
    seg_mask = (seg_ids[:, None] == seg_ids[None, :]).astype(jnp.float32)

    grid = (n_packed_padded // tr,)
    out = pl.pallas_call(
        _l2norm_packed_kernel,
        out_shape=jax.ShapeDtypeStruct((n_packed_padded, lane), out_dtype),
        grid_spec=pltpu.PrefetchScalarGridSpec(
            num_scalar_prefetch=0,
            grid=grid,
            in_specs=[
                pl.BlockSpec((tr, lane), lambda i: (i, 0)),
                pl.BlockSpec((lane, lane), lambda i: (0, 0)),  # resident mask
            ],
            out_specs=pl.BlockSpec((tr, lane), lambda i: (i, 0)),
        ),
        compiler_params=pltpu.CompilerParams(
            dimension_semantics=("parallel",),
        ),
        cost_estimate=_cost(rows, d, itemsize),
    )(xp, seg_mask)

    return out.reshape(rows_padded, d)[:rows]


def _l2_normalize_2d_rowwise(x2d, d, out_dtype):
    rows = x2d.shape[0]
    itemsize = jnp.dtype(x2d.dtype).itemsize
    tr = _pick_row_tile(rows, d * itemsize)
    rows_padded = _round_up(rows, tr)
    if rows_padded != rows:
        x2d = jnp.pad(x2d, ((0, rows_padded - rows), (0, 0)), constant_values=1)

    grid = (rows_padded // tr,)
    out = pl.pallas_call(
        _l2norm_rowwise_kernel,
        out_shape=jax.ShapeDtypeStruct((rows_padded, d), out_dtype),
        grid_spec=pltpu.PrefetchScalarGridSpec(
            num_scalar_prefetch=0,
            grid=grid,
            in_specs=[pl.BlockSpec((tr, d), lambda i: (i, 0))],
            out_specs=pl.BlockSpec((tr, d), lambda i: (i, 0)),
        ),
        compiler_params=pltpu.CompilerParams(
            dimension_semantics=("parallel",),
        ),
        cost_estimate=_cost(rows, d, itemsize),
    )(x2d)

    return out[:rows]


def l2_normalize(x):
    """x / ||x||_2 along the last dim (keepdim), matching the torch module."""
    orig_shape = x.shape
    d = orig_shape[-1]
    rows = math.prod(orig_shape[:-1]) if len(orig_shape) > 1 else 1
    x2d = x.reshape(rows, d)

    if d <= 128 and 128 % d == 0:
        out2d = _l2_normalize_2d_packed(x2d, d, x.dtype)
    else:
        out2d = _l2_normalize_2d_rowwise(x2d, d, x.dtype)

    return out2d.reshape(orig_shape)


# ---------------------------------------------------------------------------
# Self-test
# ---------------------------------------------------------------------------
if __name__ == "__main__":
    key = jax.random.PRNGKey(0)

    # NCHW input matching the original module usage: batch=2, channels=4, 16x16.
    x = jax.random.normal(key, (2, 4, 16, 16), dtype=jnp.float32)
    out = jax.block_until_ready(l2_normalize(x))
    ref = x / jnp.linalg.norm(x, ord=2, axis=-1, keepdims=True)
    assert out.shape == x.shape
    assert jnp.allclose(out, ref, atol=1e-5, rtol=1e-5), "mismatch (packed path)"

    # Exercise the padding path (rows not a multiple of the pack/tile).
    k1, k2 = jax.random.split(key)
    x_odd = jax.random.normal(k1, (3, 5, 16), dtype=jnp.float32)
    out_odd = jax.block_until_ready(l2_normalize(x_odd))
    ref_odd = x_odd / jnp.linalg.norm(x_odd, ord=2, axis=-1, keepdims=True)
    assert jnp.allclose(out_odd, ref_odd, atol=1e-5, rtol=1e-5), "mismatch (padding)"

    # Exercise the row-wise fallback path (last dim not a divisor of 128).
    x_wide = jax.random.normal(k2, (2, 4, 8, 160), dtype=jnp.float32)
    out_wide = jax.block_until_ready(l2_normalize(x_wide))
    ref_wide = x_wide / jnp.linalg.norm(x_wide, ord=2, axis=-1, keepdims=True)
    assert jnp.allclose(out_wide, ref_wide, atol=1e-5, rtol=1e-5), "mismatch (rowwise)"

    print("KERNEL_OK")
</pallas_src>

<mosaic_0001>
module attributes {stable_mosaic.version = 11 : i64} {
  func.func @_l2norm_packed_kernel(%arg0: i32, %arg1: memref<8x128xf32, #tpu.memory_space<vmem>>, %arg2: memref<128x128xf32, #tpu.memory_space<vmem>>, %arg3: memref<8x128xf32, #tpu.memory_space<vmem>>) attributes {dimension_semantics = [#tpu.dimension_semantics<parallel>], iteration_bounds = array<i64: 2>, scalar_prefetch = 0 : i64, scratch_operands = 0 : i64, tpu.core_type = #tpu.core_type<tc>, window_params = [{transform_indices = @transform_0, window_bounds = array<i64: 8, 128>}, {pipeline_mode = #tpu.pipeline_mode<synchronous>, transform_indices = @transform_1, window_bounds = array<i64: 128, 128>}, {transform_indices = @transform_2, window_bounds = array<i64: 8, 128>}]} {
    %c0 = arith.constant 0 : index
    %c0_0 = arith.constant 0 : index
    %0 = vector.load %arg1[%c0, %c0_0] : memref<8x128xf32, #tpu.memory_space<vmem>>, vector<8x128xf32>
    %1 = arith.mulf %0, %0 : vector<8x128xf32>
    %c0_1 = arith.constant 0 : index
    %c0_2 = arith.constant 0 : index
    %2 = vector.load %arg2[%c0_1, %c0_2] : memref<128x128xf32, #tpu.memory_space<vmem>>, vector<128x128xf32>
    %cst = arith.constant dense<0.000000e+00> : vector<8x128xf32>
    %3 = tpu.matmul %1, %2, %cst {dimension_numbers = #tpu.dot_dimension_numbers<[1], [0], [0], [1], [0, 0, 1, 1], [], []>, precision = #tpu.contract_precision<fp32>} : vector<8x128xf32>, vector<128x128xf32>, vector<8x128xf32> -> vector<8x128xf32>
    %4 = math.rsqrt %3 : vector<8x128xf32>
    %5 = arith.mulf %0, %4 : vector<8x128xf32>
    %c0_3 = arith.constant 0 : index
    %c0_4 = arith.constant 0 : index
    %6 = vector.load %arg3[%c0_3, %c0_4] : memref<8x128xf32, #tpu.memory_space<vmem>>, vector<8x128xf32>
    tpu.vector_store %arg3[%c0_3, %c0_4], %5 {strides = array<i32>} : memref<8x128xf32, #tpu.memory_space<vmem>>, vector<8x128xf32>,
    return
  }
  func.func @transform_0(%arg0: i32) -> (i32, i32) {
    %c0_i32 = arith.constant 0 : i32
    %c0_i32_0 = arith.constant 0 : i32
    return %arg0, %c0_i32 : i32, i32
  }
  func.func @transform_1(%arg0: i32) -> (i32, i32) {
    %c0_i32 = arith.constant 0 : i32
    %c0_i32_0 = arith.constant 0 : i32
    %c0_i32_1 = arith.constant 0 : i32
    return %c0_i32, %c0_i32_0 : i32, i32
  }
  func.func @transform_2(%arg0: i32) -> (i32, i32) {
    %c0_i32 = arith.constant 0 : i32
    %c0_i32_0 = arith.constant 0 : i32
    return %arg0, %c0_i32 : i32, i32
  }
}

</mosaic_0001>

<llo_original>
// kernel: tpu_custom_call.1
$region0: #{tpu_custom_call.1}
  #allocation0 [shape = 'u32[]', space=smem, size = 0x4, offset = 0x4, fixed_abs, tag = 'smem constant byte address 0x4 - core index']
  #allocation1 [shape = 'u32[72,128]{1,0:T(1,128)}', space=vmem, size = 0x9000, scoped, tag = 'internal scratch']
  %s0 = inlined_call_operand.hbm [shape: f32[16,128], index: 0, kind: input, shape index: {}]
  %s1 = inlined_call_operand.hbm [shape: f32[128,128], index: 1, kind: input, shape index: {}]
  %s2 = inlined_call_operand.hbm [shape: f32[16,128], index: 2, kind: output, shape index: {}]
  %s3 = sld [smem:[#allocation0]]
  $region49: #{tpu_custom_call.1} parent=0
    _
  %s5 = ssub.s32 1, %s3
  %s6 = scalar_select 0, %s5, %s3
  $region1: #{tpu_custom_call.1} parent=0
    #allocation2 [shape = 'u8[8192]{0}', space=vmem, size = 0x2000, scoped, tag = 'input window, operand 0']
    #allocation3 [shape = 's32[2]{0}', space=sflag, size = 0x8, scoped, tag = 'scoped memory for tpu_custom_call.1']
    #allocation4 [shape = 's32[2]{0}', space=sflag, size = 0x8, scoped, tag = 'scoped memory for tpu_custom_call.1']
    #allocation5 [shape = 'u8[65536]{0}', space=vmem, size = 0x10000, scoped, tag = 'input window, operand 1, single buffered']
    #allocation6 [shape = 's32[1]{0}', space=sflag, size = 0x4, scoped, tag = 'scoped memory for tpu_custom_call.1']
    #allocation7 [shape = 'u8[8192]{0}', space=vmem, size = 0x2000, scoped, tag = 'output window, operand 0']
    %7 = vsyncpa [#allocation3], 0
    %s8 = scalar_lea.sflag [#allocation3], 1
    %9 = vsyncpa %s8, 0
    %10 = vsyncpa [#allocation6], 0
    %11 = vsyncpa [#allocation4], 0
    %s12 = scalar_lea.sflag [#allocation4], 1
    %13 = vsyncpa %s12, 0
    loop: start=0, step=1, limit=4
    $region2: #{tpu_custom_call.1} parent=1 // loop_pre_header
      _
    $region3: #{tpu_custom_call.1} parent=1 // loop_header
      %s15 = sphi 0, %s19
      %p16 = scmp.ge.s32.totalorder %s15, 4
      %s25 = sphi 0, %s27
      %s28 = sphi 0, %s25
      %s29 = sphi 0, %s28
      %s45 = sphi 0, %s29
      %s49 = sphi 0, %s49
      %s51 = sphi 0, %s49
      %s52 = sphi 0, %s51
      %s66 = sphi 0, %s52
      %s72 = sphi 0, %s74
      %s75 = sphi 0, %s72
      %s76 = sphi 0, %s75
      %s92 = sphi 0, %s76
    $region4: #{tpu_custom_call.1} parent=1 // loop_header_branch
      %18 = sbr.rel (%p16) target = $region8
    $region5: #{tpu_custom_call.1} parent=1 // loop_body
      %s20 = ssub.s32 %s15, 1
      %s21 = ssub.s32 %s15, 2
      %s22 = sadd.s32 %s15, 1
      %s23 = ssub.s32 %s15, %s22
      %p24 = scmp.eq.s32.totalorder %s23, 0
      %s26 = sadd.s32 %s25, 1
      %s27 = scalar_select %p24, %s25, %s26
      %p30 = pneg %p24
      %p31 = scmp.eq.s32.totalorder %s15, 1
      %p32 = por %p30, %p31
      %p33 = scmp.ne.s32.totalorder %s25, %s28
      %p34 = scmp.eq.s32.totalorder %s15, 0
      %p35 = por %p33, %p34
      %p36 = scmp.ne.s32.totalorder %s25, %s28
      %p37 = scmp.eq.s32.totalorder %s20, 1
      %p38 = por %p36, %p37
      %p39 = scmp.ne.s32.totalorder %s28, %s29
      %p40 = scmp.eq.s32.totalorder %s20, 0
      %p41 = por %p39, %p40
      %p42 = scmp.ne.s32.totalorder %s28, %s29
      %p43 = scmp.eq.s32.totalorder %s21, 1
      %p44 = por %p42, %p43
      %p46 = scmp.ne.s32.totalorder %s29, %s45
      %p47 = scmp.eq.s32.totalorder %s21, 0
      %p48 = por %p46, %p47
      %s50 = sadd.s32 %s49, 1
      %p53 = scmp.eq.s32.totalorder %s15, 1
      %p54 = scmp.ne.s32.totalorder %s49, %s51
      %p55 = scmp.eq.s32.totalorder %s15, 0
      %p56 = por %p54, %p55
      %p57 = scmp.ne.s32.totalorder %s49, %s51
      %p58 = scmp.eq.s32.totalorder %s20, 1
      %p59 = por %p57, %p58
      %p60 = scmp.ne.s32.totalorder %s51, %s52
      %p61 = scmp.eq.s32.totalorder %s20, 0
      %p62 = por %p60, %p61
      %p63 = scmp.ne.s32.totalorder %s51, %s52
      %p64 = scmp.eq.s32.totalorder %s21, 1
      %p65 = por %p63, %p64
      %p67 = scmp.ne.s32.totalorder %s52, %s66
      %p68 = scmp.eq.s32.totalorder %s21, 0
      %p69 = por %p67, %p68
      %s70 = ssub.s32 %s15, %s22
      %p71 = scmp.eq.s32.totalorder %s70, 0
      %s73 = sadd.s32 %s72, 1
      %s74 = scalar_select %p71, %s72, %s73
      %p77 = pneg %p71
      %p78 = scmp.eq.s32.totalorder %s15, 1
      %p79 = por %p77, %p78
      %p80 = scmp.ne.s32.totalorder %s72, %s75
      %p81 = scmp.eq.s32.totalorder %s15, 0
      %p82 = por %p80, %p81
      %p83 = scmp.ne.s32.totalorder %s72, %s75
      %p84 = scmp.eq.s32.totalorder %s20, 1
      %p85 = por %p83, %p84
      %p86 = scmp.ne.s32.totalorder %s75, %s76
      %p87 = scmp.eq.s32.totalorder %s20, 0
      %p88 = por %p86, %p87
      %p89 = scmp.ne.s32.totalorder %s75, %s76
      %p90 = scmp.eq.s32.totalorder %s21, 1
      %p91 = por %p89, %p90
      %p93 = scmp.ne.s32.totalorder %s76, %s92
      %p94 = scmp.eq.s32.totalorder %s21, 0
      %p95 = por %p93, %p94
      %p96 = scmp.le.s32.totalorder 1, %s15
      %p97 = scmp.lt.s32.totalorder %s15, 3
      %p98 = pnand %p96, %p97
      %p99 = pneg %p98
      // Predicated region
      $region9: #{tpu_custom_call.1} parent=5 // pred_check
        _
      $region10: #{tpu_custom_call.1} parent=5 // pred_check_branch
        %101 = sbr.rel (%p98) target = $region12
      $region11: #{tpu_custom_call.1} parent=5 // pred_region
        %s102 = ssub.s32 %s15, 1
        // Predicated region
        $region13: #{tpu_custom_call.1} parent=11 // pred_check
          %p103 = pneg %p62
        $region14: #{tpu_custom_call.1} parent=11 // pred_check_branch
          %105 = sbr.rel (%p103) target = $region16
        $region15: #{tpu_custom_call.1} parent=11 // pred_region
          %107 = vsyncadd [#allocation6], 0
          %s108 = sshll.u32 %s1, 4
          %s109 = int_to_ptr.hbm [resolvable:$true] %s108
          %s110 = sshll.u32 [#allocation5], 4
          %s111 = int_to_ptr.vmem [resolvable:$true] %s110
          %116 = dma.hbm_to_vmem [thread:$0]  %s109, 2048, %s111, [#allocation6], 128, 128, 8
        $region16: #{tpu_custom_call.1} parent=11 // pred_fallthru
          _
      $region12: #{tpu_custom_call.1} parent=5 // pred_fallthru
        _
      %p117 = scmp.lt.s32.totalorder %s15, 2
      // Predicated region
      $region17: #{tpu_custom_call.1} parent=5 // pred_check
        %p118 = pneg %p117
      $region18: #{tpu_custom_call.1} parent=5 // pred_check_branch
        %120 = sbr.rel (%p118) target = $region20
      $region19: #{tpu_custom_call.1} parent=5 // pred_region
        // Predicated region
        $region21: #{tpu_custom_call.1} parent=19 // pred_check
          %p121 = pneg %p35
        $region22: #{tpu_custom_call.1} parent=19 // pred_check_branch
          %123 = sbr.rel (%p121) target = $region24
        $region23: #{tpu_custom_call.1} parent=19 // pred_region
          %s124 = sand.u32 %s25, 1
          %s125 = scalar_lea.sflag [#allocation3], %s124
          %s126 = sand.u32 %s25, 1
          %s127 = smul.addr %s126, 8
          %s128 = scalar_lea.vmem [#allocation2], %s127
          %130 = vsyncadd %s125, 0
          %s131 = smul.addr %s15, 8
          %s132 = scalar_lea.hbm %s0, %s131
          %s134 = sshll.u32 %s132, 4
          %s135 = int_to_ptr.hbm [resolvable:$true] %s134
          %s136 = sshll.u32 %s128, 4
          %s137 = int_to_ptr.vmem [resolvable:$true] %s136
          %139 = dma.hbm_to_vmem [thread:$0]  %s135, 128, %s137, %s125
        $region24: #{tpu_custom_call.1} parent=19 // pred_fallthru
          _
      $region20: #{tpu_custom_call.1} parent=5 // pred_fallthru
        _
      %p140 = scmp.le.s32.totalorder 1, %s15
      %p141 = scmp.lt.s32.totalorder %s15, 3
      %p142 = pnand %p140, %p141
      %p143 = pneg %p142
      // Predicated region
      $region25: #{tpu_custom_call.1} parent=5 // pred_check
        _
      $region26: #{tpu_custom_call.1} parent=5 // pred_check_branch
        %145 = sbr.rel (%p142) target = $region28
      $region27: #{tpu_custom_call.1} parent=5 // pred_region
        %s146 = ssub.s32 %s15, 1
        %s147 = sand.u32 %s28, 1
        %s148 = scalar_lea.sflag [#allocation3], %s147
        %s149 = sand.u32 %s28, 1
        %s150 = smul.addr %s149, 8
        %s151 = scalar_lea.vmem [#allocation2], %s150
        // Predicated region
        $region29: #{tpu_custom_call.1} parent=27 // pred_check
          %p152 = pneg %p41
        $region30: #{tpu_custom_call.1} parent=27 // pred_check_branch
          %154 = sbr.rel (%p152) target = $region32
        $region31: #{tpu_custom_call.1} parent=27 // pred_region
          %156 = dma.done %s148, 128
        $region32: #{tpu_custom_call.1} parent=27 // pred_fallthru
          _
        // Predicated region
        $region33: #{tpu_custom_call.1} parent=27 // pred_check
          %p157 = pneg %p62
        $region34: #{tpu_custom_call.1} parent=27 // pred_check_branch
          %159 = sbr.rel (%p157) target = $region36
        $region35: #{tpu_custom_call.1} parent=27 // pred_region
          %161 = dma.done [#allocation6], 2048
        $region36: #{tpu_custom_call.1} parent=27 // pred_fallthru
          _
        %s162 = sand.u32 %s28, 1
        %s163 = scalar_lea.sflag [#allocation3], %s162
        %s164 = sand.u32 %s28, 1
        %s165 = smul.addr %s164, 8
        %s166 = scalar_lea.vmem [#allocation2], %s165
        %p167 = pneg %p41
        %p168 = pneg %p38
        %p169 = pneg %p62
        %p170 = pneg %p59
        %p171 = pneg %p88
        %p172 = pneg %p85
        %s173 = sand.u32 %s75, 1
        %s174 = scalar_lea.sflag [#allocation4], %s173
        %s175 = sand.u32 %s75, 1
        %s176 = smul.addr %s175, 8
        %s177 = scalar_lea.vmem [#allocation7], %s176
        %v178 = vld [vmem:[%s151] sm:$0xff]
        %v179 = vmul.f32 %v178, %v178
        %v180 = vld [vmem:[#allocation5] sm:$0xff]
        %v181 = vld [vmem:[#allocation5 + $0x8] sm:$0xff]
        %v182 = vld [vmem:[#allocation5 + $0x10] sm:$0xff]
        %v183 = vld [vmem:[#allocation5 + $0x18] sm:$0xff]
        %v184 = vld [vmem:[#allocation5 + $0x20] sm:$0xff]
        %v185 = vld [vmem:[#allocation5 + $0x28] sm:$0xff]
        %v186 = vld [vmem:[#allocation5 + $0x30] sm:$0xff]
        %v187 = vld [vmem:[#allocation5 + $0x38] sm:$0xff]
        %v188 = vld [vmem:[#allocation5 + $0x40] sm:$0xff]
        %v189 = vld [vmem:[#allocation5 + $0x48] sm:$0xff]
        %v190 = vld [vmem:[#allocation5 + $0x50] sm:$0xff]
        %v191 = vld [vmem:[#allocation5 + $0x58] sm:$0xff]
        %v192 = vld [vmem:[#allocation5 + $0x60] sm:$0xff]
        %v193 = vld [vmem:[#allocation5 + $0x68] sm:$0xff]
        %v194 = vld [vmem:[#allocation5 + $0x70] sm:$0xff]
        %v195 = vld [vmem:[#allocation5 + $0x78] sm:$0xff]
        %v196 = vand.u32 %v195, 4294901760
        %197 = vmatpush.msra.mxu0 %v196
        %v198 = vand.u32 %v194, 4294901760
        %199 = vmatpush.msra.mxu0 %v198
        %v200 = vand.u32 %v193, 4294901760
        %201 = vmatpush.msra.mxu0 %v200
        %v202 = vand.u32 %v192, 4294901760
        %203 = vmatpush.msra.mxu0 %v202
        %v204 = vand.u32 %v191, 4294901760
        %205 = vmatpush.msra.mxu0 %v204
        %v206 = vand.u32 %v190, 4294901760
        %207 = vmatpush.msra.mxu0 %v206
        %v208 = vand.u32 %v189, 4294901760
        %209 = vmatpush.msra.mxu0 %v208
        %v210 = vand.u32 %v188, 4294901760
        %211 = vmatpush.msra.mxu0 %v210
        %v212 = vand.u32 %v187, 4294901760
        %213 = vmatpush.msra.mxu0 %v212
        %v214 = vand.u32 %v186, 4294901760
        %215 = vmatpush.msra.mxu0 %v214
        %v216 = vand.u32 %v185, 4294901760
        %217 = vmatpush.msra.mxu0 %v216
        %v218 = vand.u32 %v184, 4294901760
        %219 = vmatpush.msra.mxu0 %v218
        %v220 = vand.u32 %v183, 4294901760
        %221 = vmatpush.msra.mxu0 %v220
        %v222 = vand.u32 %v182, 4294901760
        %223 = vmatpush.msra.mxu0 %v222
        %v224 = vand.u32 %v181, 4294901760
        %225 = vmatpush.msra.mxu0 %v224
        %v226 = vand.u32 %v180, 4294901760
        %227 = vmatpush.msra.mxu0 %v226
        %v228 = vand.u32 %v179, 4294901760
        %v229 = vsub.f32 %v179, %v228
        %v230 = vand.u32 %v229, 4294901760
        %v231 = vsub.f32 %v229, %v230
        %v232 = vand.u32 %v231, 4294901760
        %233 = vmatmul.f32.gmra.mxu0 %v232
        %v234 = vpop.f32.mrf.mxu0
        %v235 = vadd.f32 0.0, %v234
        %236 = vdwg.mxu0
        %v237 = vand.u32 %v195, 4294901760
        %v238 = vsub.f32 %v195, %v237
        %v239 = vand.u32 %v238, 4294901760
        %v240 = vsub.f32 %v238, %v239
        %v241 = vand.u32 %v240, 4294901760
        %242 = vmatpush.msra.mxu0 %v241
        %v243 = vand.u32 %v194, 4294901760
        %v244 = vsub.f32 %v194, %v243
        %v245 = vand.u32 %v244, 4294901760
        %v246 = vsub.f32 %v244, %v245
        %v247 = vand.u32 %v246, 4294901760
        %248 = vmatpush.msra.mxu0 %v247
        %v249 = vand.u32 %v193, 4294901760
        %v250 = vsub.f32 %v193, %v249
        %v251 = vand.u32 %v250, 4294901760
        %v252 = vsub.f32 %v250, %v251
        %v253 = vand.u32 %v252, 4294901760
        %254 = vmatpush.msra.mxu0 %v253
        %v255 = vand.u32 %v192, 4294901760
        %v256 = vsub.f32 %v192, %v255
        %v257 = vand.u32 %v256, 4294901760
        %v258 = vsub.f32 %v256, %v257
        %v259 = vand.u32 %v258, 4294901760
        %260 = vmatpush.msra.mxu0 %v259
        %v261 = vand.u32 %v191, 4294901760
        %v262 = vsub.f32 %v191, %v261
        %v263 = vand.u32 %v262, 4294901760
        %v264 = vsub.f32 %v262, %v263
        %v265 = vand.u32 %v264, 4294901760
        %266 = vmatpush.msra.mxu0 %v265
        %v267 = vand.u32 %v190, 4294901760
        %v268 = vsub.f32 %v190, %v267
        %v269 = vand.u32 %v268, 4294901760
        %v270 = vsub.f32 %v268, %v269
        %v271 = vand.u32 %v270, 4294901760
        %272 = vmatpush.msra.mxu0 %v271
        %v273 = vand.u32 %v189, 4294901760
        %v274 = vsub.f32 %v189, %v273
        %v275 = vand.u32 %v274, 4294901760
        %v276 = vsub.f32 %v274, %v275
        %v277 = vand.u32 %v276, 4294901760
        %278 = vmatpush.msra.mxu0 %v277
        %v279 = vand.u32 %v188, 4294901760
        %v280 = vsub.f32 %v188, %v279
        %v281 = vand.u32 %v280, 4294901760
        %v282 = vsub.f32 %v280, %v281
        %v283 = vand.u32 %v282, 4294901760
        %284 = vmatpush.msra.mxu0 %v283
        %v285 = vand.u32 %v187, 4294901760
        %v286 = vsub.f32 %v187, %v285
        %v287 = vand.u32 %v286, 4294901760
        %v288 = vsub.f32 %v286, %v287
        %v289 = vand.u32 %v288, 4294901760
        %290 = vmatpush.msra.mxu0 %v289
        %v291 = vand.u32 %v186, 4294901760
        %v292 = vsub.f32 %v186, %v291
        %v293 = vand.u32 %v292, 4294901760
        %v294 = vsub.f32 %v292, %v293
        %v295 = vand.u32 %v294, 4294901760
        %296 = vmatpush.msra.mxu0 %v295
        %v297 = vand.u32 %v185, 4294901760
        %v298 = vsub.f32 %v185, %v297
        %v299 = vand.u32 %v298, 4294901760
        %v300 = vsub.f32 %v298, %v299
        %v301 = vand.u32 %v300, 4294901760
        %302 = vmatpush.msra.mxu0 %v301
        %v303 = vand.u32 %v184, 4294901760
        %v304 = vsub.f32 %v184, %v303
        %v305 = vand.u32 %v304, 4294901760
        %v306 = vsub.f32 %v304, %v305
        %v307 = vand.u32 %v306, 4294901760
        %308 = vmatpush.msra.mxu0 %v307
        %v309 = vand.u32 %v183, 4294901760
        %v310 = vsub.f32 %v183, %v309
        %v311 = vand.u32 %v310, 4294901760
        %v312 = vsub.f32 %v310, %v311
        %v313 = vand.u32 %v312, 4294901760
        %314 = vmatpush.msra.mxu0 %v313
        %v315 = vand.u32 %v182, 4294901760
        %v316 = vsub.f32 %v182, %v315
        %v317 = vand.u32 %v316, 4294901760
        %v318 = vsub.f32 %v316, %v317
        %v319 = vand.u32 %v318, 4294901760
        %320 = vmatpush.msra.mxu0 %v319
        %v321 = vand.u32 %v181, 4294901760
        %v322 = vsub.f32 %v181, %v321
        %v323 = vand.u32 %v322, 4294901760
        %v324 = vsub.f32 %v322, %v323
        %v325 = vand.u32 %v324, 4294901760
        %326 = vmatpush.msra.mxu0 %v325
        %v327 = vand.u32 %v180, 4294901760
        %v328 = vsub.f32 %v180, %v327
        %v329 = vand.u32 %v328, 4294901760
        %v330 = vsub.f32 %v328, %v329
        %v331 = vand.u32 %v330, 4294901760
        %332 = vmatpush.msra.mxu0 %v331
        %v333 = vand.u32 %v179, 4294901760
        %334 = vmatmul.f32.gmra.mxu0 %v333
        %v335 = vpop.f32.mrf.mxu0
        %v336 = vadd.f32 %v235, %v335
        %337 = vdwg.mxu0
        %v338 = vand.u32 %v195, 4294901760
        %v339 = vsub.f32 %v195, %v338
        %340 = vmatpush.msra.mxu0 %v339
        %v341 = vand.u32 %v194, 4294901760
        %v342 = vsub.f32 %v194, %v341
        %343 = vmatpush.msra.mxu0 %v342
        %v344 = vand.u32 %v193, 4294901760
        %v345 = vsub.f32 %v193, %v344
        %346 = vmatpush.msra.mxu0 %v345
        %v347 = vand.u32 %v192, 4294901760
        %v348 = vsub.f32 %v192, %v347
        %349 = vmatpush.msra.mxu0 %v348
        %v350 = vand.u32 %v191, 4294901760
        %v351 = vsub.f32 %v191, %v350
        %352 = vmatpush.msra.mxu0 %v351
        %v353 = vand.u32 %v190, 4294901760
        %v354 = vsub.f32 %v190, %v353
        %355 = vmatpush.msra.mxu0 %v354
        %v356 = vand.u32 %v189, 4294901760
        %v357 = vsub.f32 %v189, %v356
        %358 = vmatpush.msra.mxu0 %v357
        %v359 = vand.u32 %v188, 4294901760
        %v360 = vsub.f32 %v188, %v359
        %361 = vmatpush.msra.mxu0 %v360
        %v362 = vand.u32 %v187, 4294901760
        %v363 = vsub.f32 %v187, %v362
        %364 = vmatpush.msra.mxu0 %v363
        %v365 = vand.u32 %v186, 4294901760
        %v366 = vsub.f32 %v186, %v365
        %367 = vmatpush.msra.mxu0 %v366
        %v368 = vand.u32 %v185, 4294901760
        %v369 = vsub.f32 %v185, %v368
        %370 = vmatpush.msra.mxu0 %v369
        %v371 = vand.u32 %v184, 4294901760
        %v372 = vsub.f32 %v184, %v371
        %373 = vmatpush.msra.mxu0 %v372
        %v374 = vand.u32 %v183, 4294901760
        %v375 = vsub.f32 %v183, %v374
        %376 = vmatpush.msra.mxu0 %v375
        %v377 = vand.u32 %v182, 4294901760
        %v378 = vsub.f32 %v182, %v377
        %379 = vmatpush.msra.mxu0 %v378
        %v380 = vand.u32 %v181, 4294901760
        %v381 = vsub.f32 %v181, %v380
        %382 = vmatpush.msra.mxu0 %v381
        %v383 = vand.u32 %v180, 4294901760
        %v384 = vsub.f32 %v180, %v383
        %385 = vmatpush.msra.mxu0 %v384
        %v386 = vand.u32 %v179, 4294901760
        %v387 = vsub.f32 %v179, %v386
        %388 = vmatmul.f32.gmra.mxu0 %v387
        %v389 = vpop.f32.mrf.mxu0
        %v390 = vadd.f32 %v336, %v389
        %391 = vdwg.mxu0
        %v392 = vand.u32 %v195, 4294901760
        %393 = vmatpush.msra.mxu0 %v392
        %v394 = vand.u32 %v194, 4294901760
        %395 = vmatpush.msra.mxu0 %v394
        %v396 = vand.u32 %v193, 4294901760
        %397 = vmatpush.msra.mxu0 %v396
        %v398 = vand.u32 %v192, 4294901760
        %399 = vmatpush.msra.mxu0 %v398
        %v400 = vand.u32 %v191, 4294901760
        %401 = vmatpush.msra.mxu0 %v400
        %v402 = vand.u32 %v190, 4294901760
        %403 = vmatpush.msra.mxu0 %v402
        %v404 = vand.u32 %v189, 4294901760
        %405 = vmatpush.msra.mxu0 %v404
        %v406 = vand.u32 %v188, 4294901760
        %407 = vmatpush.msra.mxu0 %v406
        %v408 = vand.u32 %v187, 4294901760
        %409 = vmatpush.msra.mxu0 %v408
        %v410 = vand.u32 %v186, 4294901760
        %411 = vmatpush.msra.mxu0 %v410
        %v412 = vand.u32 %v185, 4294901760
        %413 = vmatpush.msra.mxu0 %v412
        %v414 = vand.u32 %v184, 4294901760
        %415 = vmatpush.msra.mxu0 %v414
        %v416 = vand.u32 %v183, 4294901760
        %417 = vmatpush.msra.mxu0 %v416
        %v418 = vand.u32 %v182, 4294901760
        %419 = vmatpush.msra.mxu0 %v418
        %v420 = vand.u32 %v181, 4294901760
        %421 = vmatpush.msra.mxu0 %v420
        %v422 = vand.u32 %v180, 4294901760
        %423 = vmatpush.msra.mxu0 %v422
        %v424 = vand.u32 %v179, 4294901760
        %v425 = vsub.f32 %v179, %v424
        %v426 = vand.u32 %v425, 4294901760
        %427 = vmatmul.f32.gmra.mxu0 %v426
        %v428 = vpop.f32.mrf.mxu0
        %v429 = vadd.f32 %v390, %v428
        %430 = vdwg.mxu0
        %v431 = vand.u32 %v195, 4294901760
        %v432 = vsub.f32 %v195, %v431
        %v433 = vand.u32 %v432, 4294901760
        %434 = vmatpush.msra.mxu0 %v433
        %v435 = vand.u32 %v194, 4294901760
        %v436 = vsub.f32 %v194, %v435
        %v437 = vand.u32 %v436, 4294901760
        %438 = vmatpush.msra.mxu0 %v437
        %v439 = vand.u32 %v193, 4294901760
        %v440 = vsub.f32 %v193, %v439
        %v441 = vand.u32 %v440, 4294901760
        %442 = vmatpush.msra.mxu0 %v441
        %v443 = vand.u32 %v192, 4294901760
        %v444 = vsub.f32 %v192, %v443
        %v445 = vand.u32 %v444, 4294901760
        %446 = vmatpush.msra.mxu0 %v445
        %v447 = vand.u32 %v191, 4294901760
        %v448 = vsub.f32 %v191, %v447
        %v449 = vand.u32 %v448, 4294901760
        %450 = vmatpush.msra.mxu0 %v449
        %v451 = vand.u32 %v190, 4294901760
        %v452 = vsub.f32 %v190, %v451
        %v453 = vand.u32 %v452, 4294901760
        %454 = vmatpush.msra.mxu0 %v453
        %v455 = vand.u32 %v189, 4294901760
        %v456 = vsub.f32 %v189, %v455
        %v457 = vand.u32 %v456, 4294901760
        %458 = vmatpush.msra.mxu0 %v457
        %v459 = vand.u32 %v188, 4294901760
        %v460 = vsub.f32 %v188, %v459
        %v461 = vand.u32 %v460, 4294901760
        %462 = vmatpush.msra.mxu0 %v461
        %v463 = vand.u32 %v187, 4294901760
        %v464 = vsub.f32 %v187, %v463
        %v465 = vand.u32 %v464, 4294901760
        %466 = vmatpush.msra.mxu0 %v465
        %v467 = vand.u32 %v186, 4294901760
        %v468 = vsub.f32 %v186, %v467
        %v469 = vand.u32 %v468, 4294901760
        %470 = vmatpush.msra.mxu0 %v469
        %v471 = vand.u32 %v185, 4294901760
        %v472 = vsub.f32 %v185, %v471
        %v473 = vand.u32 %v472, 4294901760
        %474 = vmatpush.msra.mxu0 %v473
        %v475 = vand.u32 %v184, 4294901760
        %v476 = vsub.f32 %v184, %v475
        %v477 = vand.u32 %v476, 4294901760
        %478 = vmatpush.msra.mxu0 %v477
        %v479 = vand.u32 %v183, 4294901760
        %v480 = vsub.f32 %v183, %v479
        %v481 = vand.u32 %v480, 4294901760
        %482 = vmatpush.msra.mxu0 %v481
        %v483 = vand.u32 %v182, 4294901760
        %v484 = vsub.f32 %v182, %v483
        %v485 = vand.u32 %v484, 4294901760
        %486 = vmatpush.msra.mxu0 %v485
        %v487 = vand.u32 %v181, 4294901760
        %v488 = vsub.f32 %v181, %v487
        %v489 = vand.u32 %v488, 4294901760
        %490 = vmatpush.msra.mxu0 %v489
        %v491 = vand.u32 %v180, 4294901760
        %v492 = vsub.f32 %v180, %v491
        %v493 = vand.u32 %v492, 4294901760
        %494 = vmatpush.msra.mxu0 %v493
        %v495 = vand.u32 %v179, 4294901760
        %496 = vmatmul.f32.gmra.mxu0 %v495
        %v497 = vpop.f32.mrf.mxu0
        %v498 = vadd.f32 %v429, %v497
        %499 = vdwg.mxu0
        %v500 = vand.u32 %v195, 4294901760
        %501 = vmatpush.msra.mxu0 %v500
        %v502 = vand.u32 %v194, 4294901760
        %503 = vmatpush.msra.mxu0 %v502
        %v504 = vand.u32 %v193, 4294901760
        %505 = vmatpush.msra.mxu0 %v504
        %v506 = vand.u32 %v192, 4294901760
        %507 = vmatpush.msra.mxu0 %v506
        %v508 = vand.u32 %v191, 4294901760
        %509 = vmatpush.msra.mxu0 %v508
        %v510 = vand.u32 %v190, 4294901760
        %511 = vmatpush.msra.mxu0 %v510
        %v512 = vand.u32 %v189, 4294901760
        %513 = vmatpush.msra.mxu0 %v512
        %v514 = vand.u32 %v188, 4294901760
        %515 = vmatpush.msra.mxu0 %v514
        %v516 = vand.u32 %v187, 4294901760
        %517 = vmatpush.msra.mxu0 %v516
        %v518 = vand.u32 %v186, 4294901760
        %519 = vmatpush.msra.mxu0 %v518
        %v520 = vand.u32 %v185, 4294901760
        %521 = vmatpush.msra.mxu0 %v520
        %v522 = vand.u32 %v184, 4294901760
        %523 = vmatpush.msra.mxu0 %v522
        %v524 = vand.u32 %v183, 4294901760
        %525 = vmatpush.msra.mxu0 %v524
        %v526 = vand.u32 %v182, 4294901760
        %527 = vmatpush.msra.mxu0 %v526
        %v528 = vand.u32 %v181, 4294901760
        %529 = vmatpush.msra.mxu0 %v528
        %v530 = vand.u32 %v180, 4294901760
        %531 = vmatpush.msra.mxu0 %v530
        %v532 = vand.u32 %v179, 4294901760
        %533 = vmatmul.f32.gmra.mxu0 %v532
        %v534 = vpop.f32.mrf.mxu0
        %v535 = vadd.f32 %v498, %v534
        %536 = vdwg.mxu0
        %v537 = vrsqrt.pop %v535
        %v538 = vmul.f32 %v537, %v535
        %v539 = vmul.f32 %v538, %v537
        %v540 = vmul.f32 0.5, %v539
        %v541 = vsub.f32 1.5, %v540
        %v542 = vmul.f32 %v537, %v541
        %vm543 = vweird.f32 %v535
        %vm544 = vweird.f32 %v537
        %vm545 = vmor %vm543, %vm544
        %v546 = vsel %vm545, %v537, %v542
        %v547 = vmul.f32 %v178, %v546
        %548 = vst [vmem:[%s177] sm:$0xff] %v547
        %s549 = sand.u32 %s75, 1
        %s550 = scalar_lea.sflag [#allocation4], %s549
        %s551 = sand.u32 %s75, 1
        %s552 = smul.addr %s551, 8
        %s553 = scalar_lea.vmem [#allocation7], %s552
        // Predicated region
        $region37: #{tpu_custom_call.1} parent=27 // pred_check
          %p554 = pneg %p85
        $region38: #{tpu_custom_call.1} parent=27 // pred_check_branch
          %556 = sbr.rel (%p554) target = $region40
        $region39: #{tpu_custom_call.1} parent=27 // pred_region
          %558 = vsyncadd %s550, 0
          %s559 = smul.addr %s20, 8
          %s560 = scalar_lea.hbm %s2, %s559
          %s562 = sshll.u32 %s553, 4
          %s563 = int_to_ptr.vmem [resolvable:$true] %s562
          %s564 = sshll.u32 %s560, 4
          %s565 = int_to_ptr.hbm [resolvable:$true] %s564
          %567 = dma.vmem_to_hbm [thread:$0]  %s563, 128, %s565, %s550
        $region40: #{tpu_custom_call.1} parent=27 // pred_fallthru
          _
      $region28: #{tpu_custom_call.1} parent=5 // pred_fallthru
        _
      %p568 = scmp.le.s32.totalorder 2, %s15
      // Predicated region
      $region41: #{tpu_custom_call.1} parent=5 // pred_check
        %p569 = pneg %p568
      $region42: #{tpu_custom_call.1} parent=5 // pred_check_branch
        %571 = sbr.rel (%p569) target = $region44
      $region43: #{tpu_custom_call.1} parent=5 // pred_region
        %s572 = ssub.s32 %s15, 2
        // Predicated region
        $region45: #{tpu_custom_call.1} parent=43 // pred_check
          %p573 = pneg %p91
        $region46: #{tpu_custom_call.1} parent=43 // pred_check_branch
          %575 = sbr.rel (%p573) target = $region48
        $region47: #{tpu_custom_call.1} parent=43 // pred_region
          %s576 = sand.u32 %s76, 1
          %s577 = scalar_lea.sflag [#allocation4], %s576
          %s578 = sand.u32 %s76, 1
          %s579 = smul.addr %s578, 8
          %s580 = scalar_lea.vmem [#allocation7], %s579
          %582 = dma.done %s577, 128
        $region48: #{tpu_custom_call.1} parent=43 // pred_fallthru
          _
      $region44: #{tpu_custom_call.1} parent=5 // pred_fallthru
        _
    $region6: #{tpu_custom_call.1} parent=1 // loop_footer
      %s19 = sadd.s32 1, %s15
    $region7: #{tpu_custom_call.1} parent=1 // loop_footer_branch
      %14 = sbr.rel target = $region3
    $region8: #{tpu_custom_call.1} parent=1 // loop_exit
      _
    %583 = vsyncpa [#allocation3], 1
    %s584 = scalar_lea.sflag [#allocation3], 1
    %585 = vsyncpa %s584, 1
    %586 = vsyncpa [#allocation6], 1
    %587 = vsyncpa [#allocation4], 1
    %s588 = scalar_lea.sflag [#allocation4], 1
    %589 = vsyncpa %s588, 1

</llo_original>
